<compile_context>
chip_gen: v5e
topology: v5e:2x2
jax: 0.10.0
libtpu: 0.0.40
codegen_flags: <defaults>
</compile_context>

<pallas_src>
import jax
import jax.numpy as jnp
from jax.experimental import pallas as pl
from jax.experimental.pallas import tpu as pltpu


def _round_up(n, m):
    return (n + m - 1) // m * m


# ---------------------------------------------------------------------------
# Kernel
# ---------------------------------------------------------------------------
def rpsnet_kernel(w1_ref, b1_ref, w2_ref, b2_ref, w3_ref, b3_ref, x_ref, o_ref):
    """One batch tile: activations are (features, B_tile) -> lane-dense."""
    # x may be f32 or bf16 in VMEM; upcast to f32 in-register (free-ish on VPU).
    x = x_ref[...].astype(jnp.float32)                       # (2, B_tile)

    # All three layers on the MXU with f32 accumulation; bias/ReLU on the VPU.
    # TODO(synk): pass precision=jax.lax.Precision.HIGHEST to these dots if
    # bit-tighter parity with fp32 PyTorch is ever required (negligible cost).
    h1 = jnp.dot(w1_ref[...], x, preferred_element_type=jnp.float32) + b1_ref[...]
    h1 = jnp.maximum(h1, 0.0)                                # (10, B_tile)

    h2 = jnp.dot(w2_ref[...], h1, preferred_element_type=jnp.float32) + b2_ref[...]
    h2 = jnp.maximum(h2, 0.0)                                # (10, B_tile)

    y = jnp.dot(w3_ref[...], h2, preferred_element_type=jnp.float32) + b3_ref[...]
    o_ref[...] = y.astype(o_ref.dtype)                       # (3, B_tile)


# ---------------------------------------------------------------------------
# Parameter preparation (hoist out of the per-call hot path)
# ---------------------------------------------------------------------------
def prepare_params(params):
    """Cast to f32 and reshape biases to columns. Call once per param update."""
    w1, b1, w2, b2, w3, b3 = params
    f32 = jnp.float32
    return (jnp.asarray(w1, f32),                 # (10, 2)
            jnp.asarray(b1, f32).reshape(-1, 1),  # (10, 1)
            jnp.asarray(w2, f32),                 # (10, 10)
            jnp.asarray(b2, f32).reshape(-1, 1),  # (10, 1)
            jnp.asarray(w3, f32),                 # (3, 10)
            jnp.asarray(b3, f32).reshape(-1, 1))  # (3, 1)


# ---------------------------------------------------------------------------
# Feature-major forward: (2, B) -> (3, B), no transposes
# ---------------------------------------------------------------------------
def rpsnet_forward_fmajor(x_t, prepared, *, b_tile=32768):
    """x_t: (2, B) feature-major input (f32 or bf16). Returns (3, B) f32.

    If B is a multiple of the (128-aligned) batch tile, no padding copy is
    made; otherwise the last tile is zero-padded and the output sliced back.
    VMEM budget: 2 double-buffered blocks of (<=8 sublanes x b_tile lanes)
    -> ~128 * b_tile bytes, i.e. <= 8 MiB at the 64K cap.
    """
    w1, b1, w2, b2, w3, b3 = prepared
    B = x_t.shape[1]

    # 128-aligned tile, capped at 64K lanes (VMEM budget, incl. v5e default
    # scoped limit) and at ceil(B/2) so v7x megacore gets >=2 grid steps.
    b_tile = max(128, min(_round_up(int(b_tile), 128), 65536))
    B128 = _round_up(B, 128)
    half_cap = _round_up((B128 + 1) // 2, 128)
    b_tile = max(128, min(b_tile, half_cap))

    B_pad = _round_up(B, b_tile)
    if B_pad != B:
        x_t = jnp.pad(x_t, ((0, 0), (0, B_pad - B)))

    grid = (B_pad // b_tile,)
    const = lambda i: (0, 0)
    out_t = pl.pallas_call(
        rpsnet_kernel,
        out_shape=jax.ShapeDtypeStruct((3, B_pad), jnp.float32),
        grid=grid,
        in_specs=[
            # Params: full-array blocks, constant index_map -> DMA'd once,
            # VMEM-resident across all grid steps, no in-kernel slicing.
            pl.BlockSpec((10, 2), const),
            pl.BlockSpec((10, 1), const),
            pl.BlockSpec((10, 10), const),
            pl.BlockSpec((10, 1), const),
            pl.BlockSpec((3, 10), const),
            pl.BlockSpec((3, 1), const),
            # Input tile: features on sublanes, batch on lanes (lane-dense).
            pl.BlockSpec((2, b_tile), lambda i: (0, i)),
        ],
        # Output tile: 3 sublanes x b_tile lanes -> unmasked lane-dense stores.
        out_specs=pl.BlockSpec((3, b_tile), lambda i: (0, i)),
        compiler_params=pltpu.CompilerParams(
            dimension_semantics=("parallel",)),   # 2x on v7x megacore
    )(w1, b1, w2, b2, w3, b3, x_t)

    if B_pad != B:
        out_t = out_t[:, :B]   # padded lanes computed ReLU(bias) garbage
    return out_t


# ---------------------------------------------------------------------------
# nn.Module-compatible forward: (B, 2) -> (B, 3)
# ---------------------------------------------------------------------------
def rpsnet_forward(x, prepared, *, b_tile=32768, use_bf16=False):
    """PyTorch-layout interface. `prepared` is the output of prepare_params."""
    in_dtype = jnp.bfloat16 if use_bf16 else jnp.float32
    x_t = x.astype(in_dtype).T                          # (2, B)
    out_t = rpsnet_forward_fmajor(x_t, prepared, b_tile=b_tile)
    return out_t.T                                      # (B, 3)


# ---------------------------------------------------------------------------
# Init + pure-JAX reference
# ---------------------------------------------------------------------------
def init_params(key):
    """nn.Linear-shaped params in PyTorch layout: W (out, in), b (out,)."""
    ks = jax.random.split(key, 6)

    def linear(kw, kb, fan_in, fan_out):
        bound = float(fan_in) ** -0.5   # PyTorch default U(-1/sqrt(in), 1/sqrt(in))
        w = jax.random.uniform(kw, (fan_out, fan_in), jnp.float32, -bound, bound)
        b = jax.random.uniform(kb, (fan_out,), jnp.float32, -bound, bound)
        return w, b

    w1, b1 = linear(ks[0], ks[1], 2, 10)
    w2, b2 = linear(ks[2], ks[3], 10, 10)
    w3, b3 = linear(ks[4], ks[5], 10, 3)
    return (w1, b1, w2, b2, w3, b3)


def reference_forward(x, params):
    """Pure-JAX forward, mathematically identical to the PyTorch module
    (relu(x@W1.T+b1) -> relu(.@W2.T+b2) -> .@W3.T+b3), written in the same
    batch-on-lanes orientation as the kernel so both sides see the same
    matmul rounding behaviour."""
    w1, b1, w2, b2, w3, b3 = params
    xt = x.astype(jnp.float32).T                                    # (2, B)
    h1 = jnp.maximum(jnp.dot(w1, xt) + b1[:, None], 0.0)            # (10, B)
    h2 = jnp.maximum(jnp.dot(w2, h1) + b2[:, None], 0.0)            # (10, B)
    y = jnp.dot(w3, h2) + b3[:, None]                               # (3, B)
    return y.T


# ---------------------------------------------------------------------------
# Self-test
# ---------------------------------------------------------------------------
if __name__ == "__main__":
    key = jax.random.PRNGKey(0)
    kp, kx, kx2, kx3 = jax.random.split(key, 4)

    params = init_params(kp)
    prepared = prepare_params(params)   # hoisted out of the per-call hot path

    # 1) Small RPSNet-style batch: 8 samples, 2 features (the two last moves).
    x_small = jax.random.uniform(kx, (8, 2), jnp.float32)
    out_small = jax.block_until_ready(rpsnet_forward(x_small, prepared))
    ref_small = reference_forward(x_small, params)
    assert out_small.shape == (8, 3)
    assert jnp.allclose(out_small, ref_small, atol=1e-4, rtol=1e-4), (
        float(jnp.max(jnp.abs(out_small - ref_small))))

    # 2) Larger ragged batch: multi-step grid (grid=(3,)) + padded last tile.
    x_big = jax.random.uniform(kx2, (300, 2), jnp.float32)
    out_big = jax.block_until_ready(rpsnet_forward(x_big, prepared, b_tile=128))
    ref_big = reference_forward(x_big, params)
    assert out_big.shape == (300, 3)
    assert jnp.allclose(out_big, ref_big, atol=1e-4, rtol=1e-4), (
        float(jnp.max(jnp.abs(out_big - ref_big))))

    # 3) Feature-major fast path: no transpose, no pad (B divides the tile).
    x_fm = jax.random.uniform(kx3, (2, 256), jnp.float32)
    out_fm = jax.block_until_ready(
        rpsnet_forward_fmajor(x_fm, prepared, b_tile=128))
    ref_fm = reference_forward(x_fm.T, params).T
    assert out_fm.shape == (3, 256)
    assert jnp.allclose(out_fm, ref_fm, atol=1e-4, rtol=1e-4), (
        float(jnp.max(jnp.abs(out_fm - ref_fm))))

    # 4) bf16 input-streaming path (halves per-sample HBM/VMEM traffic).
    out_bf16 = jax.block_until_ready(
        rpsnet_forward(x_big, prepared, use_bf16=True))
    assert out_bf16.shape == (300, 3)
    assert jnp.allclose(out_bf16, ref_big, atol=5e-2, rtol=5e-2), (
        float(jnp.max(jnp.abs(out_bf16 - ref_big))))

    print("KERNEL_OK")
</pallas_src>

<mosaic_0001>
module attributes {stable_mosaic.version = 11 : i64} {
  func.func @rpsnet_kernel(%arg0: i32, %arg1: memref<10x2xf32, #tpu.memory_space<vmem>>, %arg2: memref<10x1xf32, #tpu.memory_space<vmem>>, %arg3: memref<10x10xf32, #tpu.memory_space<vmem>>, %arg4: memref<10x1xf32, #tpu.memory_space<vmem>>, %arg5: memref<3x10xf32, #tpu.memory_space<vmem>>, %arg6: memref<3x1xf32, #tpu.memory_space<vmem>>, %arg7: memref<2x128xf32, #tpu.memory_space<vmem>>, %arg8: memref<3x128xf32, #tpu.memory_space<vmem>>) attributes {dimension_semantics = [#tpu.dimension_semantics<parallel>], iteration_bounds = array<i64: 1>, scalar_prefetch = 0 : i64, scratch_operands = 0 : i64, tpu.core_type = #tpu.core_type<tc>, window_params = [{pipeline_mode = #tpu.pipeline_mode<synchronous>, transform_indices = @transform_0, window_bounds = array<i64: 10, 2>}, {pipeline_mode = #tpu.pipeline_mode<synchronous>, transform_indices = @transform_1, window_bounds = array<i64: 10, 1>}, {pipeline_mode = #tpu.pipeline_mode<synchronous>, transform_indices = @transform_2, window_bounds = array<i64: 10, 10>}, {pipeline_mode = #tpu.pipeline_mode<synchronous>, transform_indices = @transform_3, window_bounds = array<i64: 10, 1>}, {pipeline_mode = #tpu.pipeline_mode<synchronous>, transform_indices = @transform_4, window_bounds = array<i64: 3, 10>}, {pipeline_mode = #tpu.pipeline_mode<synchronous>, transform_indices = @transform_5, window_bounds = array<i64: 3, 1>}, {transform_indices = @transform_6, window_bounds = array<i64: 2, 128>}, {transform_indices = @transform_7, window_bounds = array<i64: 3, 128>}]} {
    %c0 = arith.constant 0 : index
    %c0_0 = arith.constant 0 : index
    %0 = vector.load %arg7[%c0, %c0_0] : memref<2x128xf32, #tpu.memory_space<vmem>>, vector<2x128xf32>
    %c0_1 = arith.constant 0 : index
    %c0_2 = arith.constant 0 : index
    %1 = vector.load %arg1[%c0_1, %c0_2] : memref<10x2xf32, #tpu.memory_space<vmem>>, vector<10x2xf32>
    %cst = arith.constant dense<0.000000e+00> : vector<10x128xf32>
    %2 = tpu.matmul %1, %0, %cst {dimension_numbers = #tpu.dot_dimension_numbers<[1], [0], [0], [1], [0, 0, 1, 1], [], []>} : vector<10x2xf32>, vector<2x128xf32>, vector<10x128xf32> -> vector<10x128xf32>
    %c0_3 = arith.constant 0 : index
    %c0_4 = arith.constant 0 : index
    %3 = vector.load %arg2[%c0_3, %c0_4] : memref<10x1xf32, #tpu.memory_space<vmem>>, vector<10x1xf32>
    %4 = vector.broadcast %3 : vector<10x1xf32> to vector<10x128xf32>
    %5 = arith.addf %2, %4 : vector<10x128xf32>
    %cst_5 = arith.constant 0.000000e+00 : f32
    %6 = vector.broadcast %cst_5 : f32 to vector<10x128xf32>
    %7 = arith.maximumf %5, %6 : vector<10x128xf32>
    %c0_6 = arith.constant 0 : index
    %c0_7 = arith.constant 0 : index
    %8 = vector.load %arg3[%c0_6, %c0_7] : memref<10x10xf32, #tpu.memory_space<vmem>>, vector<10x10xf32>
    %cst_8 = arith.constant dense<0.000000e+00> : vector<10x128xf32>
    %9 = tpu.matmul %8, %7, %cst_8 {dimension_numbers = #tpu.dot_dimension_numbers<[1], [0], [0], [1], [0, 0, 1, 1], [], []>} : vector<10x10xf32>, vector<10x128xf32>, vector<10x128xf32> -> vector<10x128xf32>
    %c0_9 = arith.constant 0 : index
    %c0_10 = arith.constant 0 : index
    %10 = vector.load %arg4[%c0_9, %c0_10] : memref<10x1xf32, #tpu.memory_space<vmem>>, vector<10x1xf32>
    %11 = vector.broadcast %10 : vector<10x1xf32> to vector<10x128xf32>
    %12 = arith.addf %9, %11 : vector<10x128xf32>
    %cst_11 = arith.constant 0.000000e+00 : f32
    %13 = vector.broadcast %cst_11 : f32 to vector<10x128xf32>
    %14 = arith.maximumf %12, %13 : vector<10x128xf32>
    %c0_12 = arith.constant 0 : index
    %c0_13 = arith.constant 0 : index
    %15 = vector.load %arg5[%c0_12, %c0_13] : memref<3x10xf32, #tpu.memory_space<vmem>>, vector<3x10xf32>
    %cst_14 = arith.constant dense<0.000000e+00> : vector<3x128xf32>
    %16 = tpu.matmul %15, %14, %cst_14 {dimension_numbers = #tpu.dot_dimension_numbers<[1], [0], [0], [1], [0, 0, 1, 1], [], []>} : vector<3x10xf32>, vector<10x128xf32>, vector<3x128xf32> -> vector<3x128xf32>
    %c0_15 = arith.constant 0 : index
    %c0_16 = arith.constant 0 : index
    %17 = vector.load %arg6[%c0_15, %c0_16] : memref<3x1xf32, #tpu.memory_space<vmem>>, vector<3x1xf32>
    %18 = vector.broadcast %17 : vector<3x1xf32> to vector<3x128xf32>
    %19 = arith.addf %16, %18 : vector<3x128xf32>
    %c0_17 = arith.constant 0 : index
    %c0_18 = arith.constant 0 : index
    %20 = vector.load %arg8[%c0_17, %c0_18] : memref<3x128xf32, #tpu.memory_space<vmem>>, vector<3x128xf32>
    tpu.vector_store %arg8[%c0_17, %c0_18], %19 {strides = array<i32>} : memref<3x128xf32, #tpu.memory_space<vmem>>, vector<3x128xf32>,
    return
  }
  func.func @transform_0(%arg0: i32) -> (i32, i32) {
    %c0_i32 = arith.constant 0 : i32
    %c0_i32_0 = arith.constant 0 : i32
    %c0_i32_1 = arith.constant 0 : i32
    return %c0_i32, %c0_i32_0 : i32, i32
  }
  func.func @transform_1(%arg0: i32) -> (i32, i32) {
    %c0_i32 = arith.constant 0 : i32
    %c0_i32_0 = arith.constant 0 : i32
    %c0_i32_1 = arith.constant 0 : i32
    return %c0_i32, %c0_i32_0 : i32, i32
  }
  func.func @transform_2(%arg0: i32) -> (i32, i32) {
    %c0_i32 = arith.constant 0 : i32
    %c0_i32_0 = arith.constant 0 : i32
    %c0_i32_1 = arith.constant 0 : i32
    return %c0_i32, %c0_i32_0 : i32, i32
  }
  func.func @transform_3(%arg0: i32) -> (i32, i32) {
    %c0_i32 = arith.constant 0 : i32
    %c0_i32_0 = arith.constant 0 : i32
    %c0_i32_1 = arith.constant 0 : i32
    return %c0_i32, %c0_i32_0 : i32, i32
  }
  func.func @transform_4(%arg0: i32) -> (i32, i32) {
    %c0_i32 = arith.constant 0 : i32
    %c0_i32_0 = arith.constant 0 : i32
    %c0_i32_1 = arith.constant 0 : i32
    return %c0_i32, %c0_i32_0 : i32, i32
  }
  func.func @transform_5(%arg0: i32) -> (i32, i32) {
    %c0_i32 = arith.constant 0 : i32
    %c0_i32_0 = arith.constant 0 : i32
    %c0_i32_1 = arith.constant 0 : i32
    return %c0_i32, %c0_i32_0 : i32, i32
  }
  func.func @transform_6(%arg0: i32) -> (i32, i32) {
    %c0_i32 = arith.constant 0 : i32
    %c0_i32_0 = arith.constant 0 : i32
    return %c0_i32, %arg0 : i32, i32
  }
  func.func @transform_7(%arg0: i32) -> (i32, i32) {
    %c0_i32 = arith.constant 0 : i32
    %c0_i32_0 = arith.constant 0 : i32
    return %c0_i32, %arg0 : i32, i32
  }
}

</mosaic_0001>

<llo_original>
// kernel: tpu_custom_call.1
$region0: #{tpu_custom_call.1}
  #allocation0 [shape = 'u32[]', space=smem, size = 0x4, offset = 0x4, fixed_abs, tag = 'smem constant byte address 0x4 - core index']
  #allocation1 [shape = 'u32[72,128]{1,0:T(1,128)}', space=vmem, size = 0x9000, scoped, tag = 'internal scratch']
  %s0 = inlined_call_operand.vmem [shape: f32[10,2], index: 0, kind: input, shape index: {}]
  %s1 = inlined_call_operand.vmem [shape: f32[10,1], index: 1, kind: input, shape index: {}]
  %s2 = inlined_call_operand.vmem [shape: f32[10,10], index: 2, kind: input, shape index: {}]
  %s3 = inlined_call_operand.vmem [shape: f32[10,1], index: 3, kind: input, shape index: {}]
  %s4 = inlined_call_operand.vmem [shape: f32[3,10], index: 4, kind: input, shape index: {}]
  %s5 = inlined_call_operand.vmem [shape: f32[3,1], index: 5, kind: input, shape index: {}]
  %s6 = inlined_call_operand.vmem [shape: f32[2,128], index: 6, kind: input, shape index: {}]
  %s7 = inlined_call_operand.hbm [shape: f32[3,128], index: 7, kind: output, shape index: {}]
  %s8 = sld [smem:[#allocation0]]
  $region38: #{tpu_custom_call.1} parent=0
    _
  %s10 = ssub.s32 1, %s8
  %s11 = scalar_select 0, %s10, %s8
  $region1: #{tpu_custom_call.1} parent=0
    #allocation2 [shape = 'u8[2048]{0}', space=vmem, size = 0x800, scoped, tag = 'output window, operand 0, single buffered']
    #allocation3 [shape = 's32[1]{0}', space=sflag, size = 0x4, scoped, tag = 'scoped memory for tpu_custom_call.1']
    %12 = vsyncpa [#allocation3], 0
    // Predicated region
    $region2: #{tpu_custom_call.1} parent=1 // pred_check
      _
    $region3: #{tpu_custom_call.1} parent=1 // pred_check_branch
      %14 = sbr.rel (0) target = $region5
    $region4: #{tpu_custom_call.1} parent=1 // pred_region
      _
    $region5: #{tpu_custom_call.1} parent=1 // pred_fallthru
      _
    // Predicated region
    $region6: #{tpu_custom_call.1} parent=1 // pred_check
      _
    $region7: #{tpu_custom_call.1} parent=1 // pred_check_branch
      %16 = sbr.rel (0) target = $region9
    $region8: #{tpu_custom_call.1} parent=1 // pred_region
      _
    $region9: #{tpu_custom_call.1} parent=1 // pred_fallthru
      _
    // Predicated region
    $region10: #{tpu_custom_call.1} parent=1 // pred_check
      _
    $region11: #{tpu_custom_call.1} parent=1 // pred_check_branch
      %18 = sbr.rel (0) target = $region13
    $region12: #{tpu_custom_call.1} parent=1 // pred_region
      _
    $region13: #{tpu_custom_call.1} parent=1 // pred_fallthru
      _
    // Predicated region
    $region14: #{tpu_custom_call.1} parent=1 // pred_check
      _
    $region15: #{tpu_custom_call.1} parent=1 // pred_check_branch
      %20 = sbr.rel (0) target = $region17
    $region16: #{tpu_custom_call.1} parent=1 // pred_region
      _
    $region17: #{tpu_custom_call.1} parent=1 // pred_fallthru
      _
    // Predicated region
    $region18: #{tpu_custom_call.1} parent=1 // pred_check
      _
    $region19: #{tpu_custom_call.1} parent=1 // pred_check_branch
      %22 = sbr.rel (0) target = $region21
    $region20: #{tpu_custom_call.1} parent=1 // pred_region
      _
    $region21: #{tpu_custom_call.1} parent=1 // pred_fallthru
      _
    // Predicated region
    $region22: #{tpu_custom_call.1} parent=1 // pred_check
      _
    $region23: #{tpu_custom_call.1} parent=1 // pred_check_branch
      %24 = sbr.rel (0) target = $region25
    $region24: #{tpu_custom_call.1} parent=1 // pred_region
      _
    $region25: #{tpu_custom_call.1} parent=1 // pred_fallthru
      _
    // Predicated region
    $region26: #{tpu_custom_call.1} parent=1 // pred_check
      _
    $region27: #{tpu_custom_call.1} parent=1 // pred_check_branch
      %26 = sbr.rel (0) target = $region29
    $region28: #{tpu_custom_call.1} parent=1 // pred_region
      _
    $region29: #{tpu_custom_call.1} parent=1 // pred_fallthru
      _
    %v27 = vld [vmem:[%s6] sm:$0x3]
    %v28 = vld [vmem:[%s0] sm:$0xff]
    %v29 = vld [vmem:[%s0 + $0x8] sm:$0x3]
    %v30 = vld [vmem:[%s1] sm:$0xff]
    %v31 = vld [vmem:[%s1 + $0x8] sm:$0x3]
    %33 = vset.pattern.permute.xlu0 0
    %34 = vperm.xlu0 %33, %v30
    %v35 = vpop.permute.xlu0 %34
    %38 = vset.pattern.permute.xlu0 0
    %39 = vperm.xlu0 %38, %v31
    %v40 = vpop.permute.xlu0 %39
    %vm42 = vcmask 15360
    %v44 = vsel %vm42, %v28, 0
    %v47 = vsel %vm42, %v29, 0
    %vm49 = vcmask 1041408
    %v51 = vsel %vm49, %v27, 0
    %53 = vmatpush.msra.mxu0 0.0
    %54 = vmatpush.msra.mxu0 0.0
    %55 = vmatpush.msra.mxu0 0.0
    %56 = vmatpush.msra.mxu0 0.0
    %57 = vmatpush.msra.mxu0 0.0
    %58 = vmatpush.msra.mxu0 0.0
    %59 = vmatpush.msra.mxu0 0.0
    %60 = vmatpush.msra.mxu0 0.0
    %61 = vmatpush.msra.mxu0 0.0
    %62 = vmatpush.msra.mxu0 0.0
    %63 = vmatpush.msra.mxu0 0.0
    %64 = vmatpush.msra.mxu0 0.0
    %65 = vmatpush.msra.mxu0 0.0
    %66 = vmatpush.msra.mxu0 0.0
    %67 = vmatpush.msra.mxu0 0.0
    %68 = vmatpush.msra.mxu0 %v51
    %69 = vmatmul.f32.gmra.mxu0 %v44
    %v70 = vpop.f32.mrf.mxu0
    %v71 = vadd.f32 %v35, %v70
    %72 = vmatmul.f32.gmra.mxu0 %v47
    %v73 = vpop.f32.mrf.mxu0
    %v74 = vadd.f32 %v40, %v73
    %75 = vdwg.mxu0
    %v76 = vmax.f32 %v71, 0.0
    %v77 = vmax.f32 %v74, 0.0
    %v78 = vld [vmem:[%s2] sm:$0xff]
    %v79 = vld [vmem:[%s2 + $0x8] sm:$0x3]
    %v80 = vld [vmem:[%s3] sm:$0xff]
    %v81 = vld [vmem:[%s3 + $0x8] sm:$0x3]
    %83 = vset.pattern.permute.xlu0 0
    %84 = vperm.xlu0 %83, %v80
    %v85 = vpop.permute.xlu0 %84
    %88 = vset.pattern.permute.xlu0 0
    %89 = vperm.xlu0 %88, %v81
    %v90 = vpop.permute.xlu0 %89
    %vm92 = vcmask 80896
    %v94 = vsel %vm92, %v78, 0
    %v97 = vsel %vm92, %v79, 0
    %v100 = vsel %vm49, %v77, 0
    %102 = vmatpush.msra.mxu0 0.0
    %103 = vmatpush.msra.mxu0 0.0
    %104 = vmatpush.msra.mxu0 0.0
    %105 = vmatpush.msra.mxu0 0.0
    %106 = vmatpush.msra.mxu0 0.0
    %107 = vmatpush.msra.mxu0 0.0
    %108 = vmatpush.msra.mxu0 0.0
    %109 = vmatpush.msra.mxu0 0.0
    %110 = vmatpush.msra.mxu0 0.0
    %111 = vmatpush.msra.mxu0 0.0
    %112 = vmatpush.msra.mxu0 0.0
    %113 = vmatpush.msra.mxu0 0.0
    %114 = vmatpush.msra.mxu0 0.0
    %115 = vmatpush.msra.mxu0 0.0
    %116 = vmatpush.msra.mxu0 %v100
    %117 = vmatpush.msra.mxu0 %v76
    %118 = vmatmul.f32.gmra.mxu0 %v94
    %v119 = vpop.f32.mrf.mxu0
    %v120 = vadd.f32 %v85, %v119
    %121 = vmatmul.f32.gmra.mxu0 %v97
    %v122 = vpop.f32.mrf.mxu0
    %v123 = vadd.f32 %v90, %v122
    %124 = vdwg.mxu0
    %v125 = vmax.f32 %v120, 0.0
    %v126 = vmax.f32 %v123, 0.0
    %v127 = vld [vmem:[%s4] sm:$0x7]
    %v128 = vld [vmem:[%s5] sm:$0x7]
    %130 = vset.pattern.permute.xlu0 0
    %131 = vperm.xlu0 %130, %v128
    %v132 = vpop.permute.xlu0 %131
    %v135 = vsel %vm92, %v127, 0
    %v138 = vsel %vm49, %v126, 0
    %140 = vmatpush.msra.mxu0 0.0
    %141 = vmatpush.msra.mxu0 0.0
    %142 = vmatpush.msra.mxu0 0.0
    %143 = vmatpush.msra.mxu0 0.0
    %144 = vmatpush.msra.mxu0 0.0
    %145 = vmatpush.msra.mxu0 0.0
    %146 = vmatpush.msra.mxu0 0.0
    %147 = vmatpush.msra.mxu0 0.0
    %148 = vmatpush.msra.mxu0 0.0
    %149 = vmatpush.msra.mxu0 0.0
    %150 = vmatpush.msra.mxu0 0.0
    %151 = vmatpush.msra.mxu0 0.0
    %152 = vmatpush.msra.mxu0 0.0
    %153 = vmatpush.msra.mxu0 0.0
    %154 = vmatpush.msra.mxu0 %v138
    %155 = vmatpush.msra.mxu0 %v125
    %156 = vmatmul.f32.gmra.mxu0 %v135
    %v157 = vpop.f32.mrf.mxu0
    %v158 = vadd.f32 %v132, %v157
    %159 = vdwg.mxu0
    %160 = vst [vmem:[#allocation2] sm:$0x7] %v158
    // Predicated region
    $region30: #{tpu_custom_call.1} parent=1 // pred_check
      _
    $region31: #{tpu_custom_call.1} parent=1 // pred_check_branch
      %162 = sbr.rel (0) target = $region33
    $region32: #{tpu_custom_call.1} parent=1 // pred_region
      %164 = vsyncadd [#allocation3], 0
      %s166 = sshll.u32 [#allocation2], 4
      %s167 = int_to_ptr.vmem [resolvable:$true] %s166
      %s168 = sshll.u32 %s7, 4
      %s169 = int_to_ptr.hbm [resolvable:$true] %s168
      %171 = dma.vmem_to_hbm [thread:$0]  %s167, 64, %s169, [#allocation3]
    $region33: #{tpu_custom_call.1} parent=1 // pred_fallthru
      _
    // Predicated region
    $region34: #{tpu_custom_call.1} parent=1 // pred_check
      _
    $region35: #{tpu_custom_call.1} parent=1 // pred_check_branch
      %173 = sbr.rel (0) target = $region37
    $region36: #{tpu_custom_call.1} parent=1 // pred_region
      %175 = dma.done [#allocation3], 64
    $region37: #{tpu_custom_call.1} parent=1 // pred_fallthru
      _
    %176 = vsyncpa [#allocation3], 1

</llo_original>
